<compile_context>
chip_gen: v5e
topology: v5e:2x2
jax: 0.10.0
libtpu: 0.0.40
codegen_flags: <defaults>
</compile_context>

<pallas_src>
import math

import jax
import jax.numpy as jnp
from jax.experimental import pallas as pl
from jax.experimental.pallas import tpu as pltpu


def _round_up(x, m):
    return ((x + m - 1) // m) * m


def _cdiv(a, b):
    return -(-a // b)


# Cody-Waite split of pi/2 (cephes sinf constants x2) and minimax polynomials
# for sin/cos on [-pi/4, pi/4].  Accurate (~1 ulp f32) for |x| up to ~2e3.
_TWO_OVER_PI = 0.6366197723675814
_PIO2_1 = 1.5703125
_PIO2_2 = 4.837512969970703125e-4
_PIO2_3 = 7.54978995489188216e-8
_S1, _S2, _S3 = -1.6666654611e-1, 8.3321608736e-3, -1.9515295891e-4
_C1, _C2, _C3 = 4.166664568298827e-2, -1.388731625493765e-3, 2.443315711809948e-5


def sine_encoding_kernel(e_ref, div_ref, quad_ref, w_e_ref, w_sc_ref, b_ref, o_ref):
    e = e_ref[...]                                   # [TM, 1] f32
    x = e * div_ref[...]                             # [TM, H] f32; 100*e*div (halves duplicated)

    # Bounded-range sine (VPU only): reduce mod pi/2 with a 3-term Cody-Waite
    # split, evaluate both quadrant polynomials, select by quadrant.  The cos
    # lanes of the slab use the SAME reduced r with quadrant index + 1
    # (cos(x) = sin(x + pi/2)) -- no f32 pi/2 addition, no libm sin.
    k = jnp.floor(x * _TWO_OVER_PI + 0.5)            # quadrant number (integer-valued f32)
    r = x - k * _PIO2_1
    r = r - k * _PIO2_2
    r = r - k * _PIO2_3                              # r in [-pi/4, pi/4]
    r2 = r * r
    sin_r = r + r * r2 * (_S1 + r2 * (_S2 + r2 * _S3))
    cos_r = 1.0 - 0.5 * r2 + r2 * r2 * (_C1 + r2 * (_C2 + r2 * _C3))

    n = (k.astype(jnp.int32) + quad_ref[...]) & 3    # quad table: 0 -> sin lanes, 1 -> cos lanes
    val = jnp.where((n & 1) == 1, cos_r, sin_r)
    val = jnp.where((n & 2) == 2, -val, val)         # fused [sin(pe) | cos(pe)] slab, f32

    sc = val.astype(w_sc_ref.dtype)                  # bf16 (or f32) MXU operand
    out = e * w_e_ref[...]                           # raw-e column of the Linear (f32, VPU)
    out = out + jnp.dot(sc, w_sc_ref[...],
                        preferred_element_type=jnp.float32)
    out = out + b_ref[...]                           # [1,H] broadcast
    o_ref[...] = out.astype(o_ref.dtype)


def sine_encoding(e, weight, bias, hidden_dim, *, block_rows=2048,
                  mxu_dtype=jnp.bfloat16, out_dtype=jnp.float32):
    """e: [N] f32, weight: [H, H+1] (PyTorch Linear layout), bias: [H]."""
    N = int(e.shape[0])
    H = int(hidden_dim)
    assert H % 2 == 0, "hidden_dim must be even (arange(0, H, 2) split)"
    half = H // 2

    # Trace-time constant tables (x100 folded into div; cos via +1 quadrant).
    div = 100.0 * jnp.exp(
        jnp.arange(0, H, 2, dtype=jnp.float32) * (-math.log(10000.0) / H)
    )                                                                 # [H/2]
    div_full = jnp.concatenate([div, div]).reshape(1, H)              # [1, H]
    quad = jnp.concatenate(
        [jnp.zeros((half,), jnp.int32), jnp.ones((half,), jnp.int32)]
    ).reshape(1, H)                                                   # [1, H]

    w_t = weight.astype(jnp.float32).T               # [H+1, H]
    w_e = w_t[0:1, :]                                # [1, H] raw-e column (f32 VPU path)
    w_sc = w_t[1:, :].astype(mxu_dtype)              # [H, H] fused sin|cos weights
    b2 = bias.reshape(1, H).astype(jnp.float32)

    # Row tiling.  No padding of N: grid = cdiv(N, TM); Pallas masks the
    # partial last block (no dead-row compute tiles, no writeback of padding,
    # no post-hoc out[:N] copy).  TM kept a multiple of 16 (bf16-friendly).
    TM = min(block_rows, _round_up(N, 16))
    steps = _cdiv(N, TM)
    # v7x: keep the number of "parallel" grid steps even so both TensorCores
    # get equal work (only when N is large enough that one extra ~0.35 us grid
    # step is noise; single-TC v5e/v6e are unaffected beyond that).
    if N >= 1024 and steps % 2 == 1:
        steps += 1
        TM = _round_up(_cdiv(N, steps), 16)
        steps = _cdiv(N, TM)
    grid = (steps,)

    e2 = e.reshape(N, 1).astype(jnp.float32)

    out_itemsize = jnp.dtype(out_dtype).itemsize
    cost = pl.CostEstimate(
        flops=2 * N * H * H + 40 * N * H,            # matmul + VPU sin/cos polynomials
        transcendentals=0,                           # no EUP/libm sine anymore
        bytes_accessed=(4 * N + N * H * out_itemsize           # e in, out
                        + 4 * (3 * H)                           # div, quad, w_e
                        + int(w_sc.size) * w_sc.dtype.itemsize  # w_sincos
                        + 4 * H),                               # bias
    )

    return pl.pallas_call(
        sine_encoding_kernel,
        out_shape=jax.ShapeDtypeStruct((N, H), out_dtype),
        grid_spec=pltpu.PrefetchScalarGridSpec(
            num_scalar_prefetch=0,
            grid=grid,
            in_specs=[
                pl.BlockSpec((TM, 1), lambda i: (i, 0)),    # e rows (tiled)
                pl.BlockSpec((1, H), lambda i: (0, 0)),     # div table (resident)
                pl.BlockSpec((1, H), lambda i: (0, 0)),     # quadrant table (resident)
                pl.BlockSpec((1, H), lambda i: (0, 0)),     # w_e (resident)
                pl.BlockSpec((H, H), lambda i: (0, 0)),     # w_sincos (resident)
                pl.BlockSpec((1, H), lambda i: (0, 0)),     # bias (resident)
            ],
            out_specs=pl.BlockSpec((TM, H), lambda i: (i, 0)),
        ),
        compiler_params=pltpu.CompilerParams(
            dimension_semantics=("parallel",),
            vmem_limit_bytes=32 * 1024 * 1024,
        ),
        cost_estimate=cost,
    )(e2, div_full, quad, w_e, w_sc, b2)


def sine_encoding_ref(e, weight, bias, hidden_dim):
    """Pure-JAX reference mirroring the PyTorch forward."""
    H = hidden_dim
    ee = e * 100.0
    div = jnp.exp(jnp.arange(0, H, 2, dtype=jnp.float32) * (-math.log(10000.0) / H))
    pe = ee[:, None] * div
    eeig = jnp.concatenate([e[:, None], jnp.sin(pe), jnp.cos(pe)], axis=1)
    return eeig @ weight.T + bias


def _make_inputs(key, N, H):
    k_e, k_w, k_b = jax.random.split(key, 3)
    e = jax.random.uniform(k_e, (N,), dtype=jnp.float32, minval=0.0, maxval=2.0)
    fan_in, fan_out = H + 1, H
    limit = math.sqrt(6.0 / (fan_in + fan_out))
    weight = jax.random.uniform(k_w, (H, H + 1), dtype=jnp.float32,
                                minval=-limit, maxval=limit)
    b_bound = 1.0 / math.sqrt(fan_in)
    bias = jax.random.uniform(k_b, (H,), dtype=jnp.float32,
                              minval=-b_bound, maxval=b_bound)
    return e, weight, bias


if __name__ == "__main__":
    key_small, key_big = jax.random.split(jax.random.PRNGKey(0))

    # Small shapes consistent with the module: N=8 eigenvalues, hidden=32.
    # Exact-f32 matmul path -> tight tolerance.
    N, H = 8, 32
    e, w, b = _make_inputs(key_small, N, H)
    out = jax.block_until_ready(sine_encoding(e, w, b, H, mxu_dtype=jnp.float32))
    ref = sine_encoding_ref(e, w, b, H)
    assert out.shape == (N, H)
    assert jnp.allclose(out, ref, atol=2e-3, rtol=2e-3), "f32 small-case mismatch"

    # Module default hidden_dim=128, N not a multiple of the tile (masked
    # partial last block), multi-step grid with even step count (block_rows=512
    # -> 3 steps rebalanced to 4), plus the default single-/two-step path and
    # the bf16-writeback path.
    N, H = 1037, 128
    e, w, b = _make_inputs(key_big, N, H)
    ref = sine_encoding_ref(e, w, b, H)
    out_f32 = jax.block_until_ready(
        sine_encoding(e, w, b, H, block_rows=512, mxu_dtype=jnp.float32))
    out_bf16 = jax.block_until_ready(sine_encoding(e, w, b, H, block_rows=512))
    out_default = jax.block_until_ready(sine_encoding(e, w, b, H))
    out_bf16o = jax.block_until_ready(
        sine_encoding(e, w, b, H, out_dtype=jnp.bfloat16))
    assert out_f32.shape == (N, H) and out_bf16.shape == (N, H)
    assert jnp.allclose(out_f32, ref, atol=2e-3, rtol=2e-3), "f32 grid-case mismatch"
    assert jnp.allclose(out_bf16, ref, atol=5e-2, rtol=5e-2), "bf16 MXU mismatch"
    assert jnp.allclose(out_default, ref, atol=5e-2, rtol=5e-2), "default-tile mismatch"
    assert jnp.allclose(out_bf16o.astype(jnp.float32), ref,
                        atol=5e-2, rtol=5e-2), "bf16 output mismatch"

    print("KERNEL_OK")
</pallas_src>

<mosaic_0001>
module attributes {stable_mosaic.version = 11 : i64} {
  func.func @sine_encoding_kernel(%arg0: i32, %arg1: memref<16x1xf32, #tpu.memory_space<vmem>>, %arg2: memref<1x32xf32, #tpu.memory_space<vmem>>, %arg3: memref<1x32xi32, #tpu.memory_space<vmem>>, %arg4: memref<1x32xf32, #tpu.memory_space<vmem>>, %arg5: memref<32x32xf32, #tpu.memory_space<vmem>>, %arg6: memref<1x32xf32, #tpu.memory_space<vmem>>, %arg7: memref<16x32xf32, #tpu.memory_space<vmem>>) attributes {dimension_semantics = [#tpu.dimension_semantics<parallel>], iteration_bounds = array<i64: 1>, scalar_prefetch = 0 : i64, scratch_operands = 0 : i64, tpu.core_type = #tpu.core_type<tc>, window_params = [{transform_indices = @transform_0, window_bounds = array<i64: 16, 1>}, {pipeline_mode = #tpu.pipeline_mode<synchronous>, transform_indices = @transform_1, window_bounds = array<i64: 1, 32>}, {pipeline_mode = #tpu.pipeline_mode<synchronous>, transform_indices = @transform_2, window_bounds = array<i64: 1, 32>}, {pipeline_mode = #tpu.pipeline_mode<synchronous>, transform_indices = @transform_3, window_bounds = array<i64: 1, 32>}, {pipeline_mode = #tpu.pipeline_mode<synchronous>, transform_indices = @transform_4, window_bounds = array<i64: 32, 32>}, {pipeline_mode = #tpu.pipeline_mode<synchronous>, transform_indices = @transform_5, window_bounds = array<i64: 1, 32>}, {transform_indices = @transform_6, window_bounds = array<i64: 16, 32>}]} {
    %c0 = arith.constant 0 : index
    %c0_0 = arith.constant 0 : index
    %0 = vector.load %arg1[%c0, %c0_0] : memref<16x1xf32, #tpu.memory_space<vmem>>, vector<16x1xf32>
    %c0_1 = arith.constant 0 : index
    %c0_2 = arith.constant 0 : index
    %1 = vector.load %arg2[%c0_1, %c0_2] : memref<1x32xf32, #tpu.memory_space<vmem>>, vector<1x32xf32>
    %2 = vector.broadcast %0 : vector<16x1xf32> to vector<16x32xf32>
    %3 = vector.broadcast %1 : vector<1x32xf32> to vector<16x32xf32>
    %4 = arith.mulf %2, %3 : vector<16x32xf32>
    %cst = arith.constant 0.636619746 : f32
    %5 = vector.broadcast %cst : f32 to vector<16x32xf32>
    %6 = arith.mulf %4, %5 : vector<16x32xf32>
    %cst_3 = arith.constant 5.000000e-01 : f32
    %7 = vector.broadcast %cst_3 : f32 to vector<16x32xf32>
    %8 = arith.addf %6, %7 : vector<16x32xf32>
    %9 = math.floor %8 : vector<16x32xf32>
    %cst_4 = arith.constant 1.5703125 : f32
    %10 = vector.broadcast %cst_4 : f32 to vector<16x32xf32>
    %11 = arith.mulf %9, %10 : vector<16x32xf32>
    %12 = arith.subf %4, %11 : vector<16x32xf32>
    %cst_5 = arith.constant 4.83751297E-4 : f32
    %13 = vector.broadcast %cst_5 : f32 to vector<16x32xf32>
    %14 = arith.mulf %9, %13 : vector<16x32xf32>
    %15 = arith.subf %12, %14 : vector<16x32xf32>
    %cst_6 = arith.constant 7.549790e-08 : f32
    %16 = vector.broadcast %cst_6 : f32 to vector<16x32xf32>
    %17 = arith.mulf %9, %16 : vector<16x32xf32>
    %18 = arith.subf %15, %17 : vector<16x32xf32>
    %19 = arith.mulf %18, %18 : vector<16x32xf32>
    %20 = arith.mulf %18, %19 : vector<16x32xf32>
    %cst_7 = arith.constant -1.95152956E-4 : f32
    %21 = vector.broadcast %cst_7 : f32 to vector<16x32xf32>
    %22 = arith.mulf %19, %21 : vector<16x32xf32>
    %cst_8 = arith.constant 0.00833216123 : f32
    %23 = vector.broadcast %cst_8 : f32 to vector<16x32xf32>
    %24 = arith.addf %23, %22 : vector<16x32xf32>
    %25 = arith.mulf %19, %24 : vector<16x32xf32>
    %cst_9 = arith.constant -0.166666552 : f32
    %26 = vector.broadcast %cst_9 : f32 to vector<16x32xf32>
    %27 = arith.addf %26, %25 : vector<16x32xf32>
    %28 = arith.mulf %20, %27 : vector<16x32xf32>
    %29 = arith.addf %18, %28 : vector<16x32xf32>
    %cst_10 = arith.constant 5.000000e-01 : f32
    %30 = vector.broadcast %cst_10 : f32 to vector<16x32xf32>
    %31 = arith.mulf %30, %19 : vector<16x32xf32>
    %cst_11 = arith.constant 1.000000e+00 : f32
    %32 = vector.broadcast %cst_11 : f32 to vector<16x32xf32>
    %33 = arith.subf %32, %31 : vector<16x32xf32>
    %34 = arith.mulf %19, %19 : vector<16x32xf32>
    %cst_12 = arith.constant 2.44331568E-5 : f32
    %35 = vector.broadcast %cst_12 : f32 to vector<16x32xf32>
    %36 = arith.mulf %19, %35 : vector<16x32xf32>
    %cst_13 = arith.constant -0.00138873165 : f32
    %37 = vector.broadcast %cst_13 : f32 to vector<16x32xf32>
    %38 = arith.addf %37, %36 : vector<16x32xf32>
    %39 = arith.mulf %19, %38 : vector<16x32xf32>
    %cst_14 = arith.constant 0.0416666456 : f32
    %40 = vector.broadcast %cst_14 : f32 to vector<16x32xf32>
    %41 = arith.addf %40, %39 : vector<16x32xf32>
    %42 = arith.mulf %34, %41 : vector<16x32xf32>
    %43 = arith.addf %33, %42 : vector<16x32xf32>
    %44 = arith.fptosi %9 : vector<16x32xf32> to vector<16x32xi32>
    %c0_15 = arith.constant 0 : index
    %c0_16 = arith.constant 0 : index
    %45 = vector.load %arg3[%c0_15, %c0_16] : memref<1x32xi32, #tpu.memory_space<vmem>>, vector<1x32xi32>
    %46 = vector.broadcast %45 : vector<1x32xi32> to vector<16x32xi32>
    %47 = arith.addi %44, %46 : vector<16x32xi32>
    %c3_i32 = arith.constant 3 : i32
    %48 = vector.broadcast %c3_i32 : i32 to vector<16x32xi32>
    %49 = arith.andi %47, %48 : vector<16x32xi32>
    %c1_i32 = arith.constant 1 : i32
    %50 = vector.broadcast %c1_i32 : i32 to vector<16x32xi32>
    %51 = arith.andi %49, %50 : vector<16x32xi32>
    %c1_i32_17 = arith.constant 1 : i32
    %52 = vector.broadcast %c1_i32_17 : i32 to vector<16x32xi32>
    %53 = arith.cmpi eq, %51, %52 : vector<16x32xi32>
    %54 = arith.select %53, %43, %29 : vector<16x32xi1>, vector<16x32xf32>
    %c2_i32 = arith.constant 2 : i32
    %55 = vector.broadcast %c2_i32 : i32 to vector<16x32xi32>
    %56 = arith.andi %49, %55 : vector<16x32xi32>
    %c2_i32_18 = arith.constant 2 : i32
    %57 = vector.broadcast %c2_i32_18 : i32 to vector<16x32xi32>
    %58 = arith.cmpi eq, %56, %57 : vector<16x32xi32>
    %cst_19 = arith.constant 0.000000e+00 : f32
    %59 = vector.broadcast %cst_19 : f32 to vector<16x32xf32>
    %60 = arith.subf %59, %54 : vector<16x32xf32>
    %61 = arith.select %58, %60, %54 : vector<16x32xi1>, vector<16x32xf32>
    %c0_20 = arith.constant 0 : index
    %c0_21 = arith.constant 0 : index
    %62 = vector.load %arg4[%c0_20, %c0_21] : memref<1x32xf32, #tpu.memory_space<vmem>>, vector<1x32xf32>
    %63 = vector.broadcast %0 : vector<16x1xf32> to vector<16x32xf32>
    %64 = vector.broadcast %62 : vector<1x32xf32> to vector<16x32xf32>
    %65 = arith.mulf %63, %64 : vector<16x32xf32>
    %c0_22 = arith.constant 0 : index
    %c0_23 = arith.constant 0 : index
    %66 = vector.load %arg5[%c0_22, %c0_23] : memref<32x32xf32, #tpu.memory_space<vmem>>, vector<32x32xf32>
    %cst_24 = arith.constant dense<0.000000e+00> : vector<16x32xf32>
    %67 = tpu.matmul %61, %66, %cst_24 {dimension_numbers = #tpu.dot_dimension_numbers<[1], [0], [0], [1], [0, 0, 1, 1], [], []>} : vector<16x32xf32>, vector<32x32xf32>, vector<16x32xf32> -> vector<16x32xf32>
    %68 = arith.addf %65, %67 : vector<16x32xf32>
    %c0_25 = arith.constant 0 : index
    %c0_26 = arith.constant 0 : index
    %69 = vector.load %arg6[%c0_25, %c0_26] : memref<1x32xf32, #tpu.memory_space<vmem>>, vector<1x32xf32>
    %70 = vector.broadcast %69 : vector<1x32xf32> to vector<16x32xf32>
    %71 = arith.addf %68, %70 : vector<16x32xf32>
    %c0_27 = arith.constant 0 : index
    %c0_28 = arith.constant 0 : index
    %72 = vector.load %arg7[%c0_27, %c0_28] : memref<16x32xf32, #tpu.memory_space<vmem>>, vector<16x32xf32>
    tpu.vector_store %arg7[%c0_27, %c0_28], %71 {strides = array<i32>} : memref<16x32xf32, #tpu.memory_space<vmem>>, vector<16x32xf32>,
    return
  }
  func.func @transform_0(%arg0: i32) -> (i32, i32) {
    %c0_i32 = arith.constant 0 : i32
    %c0_i32_0 = arith.constant 0 : i32
    return %arg0, %c0_i32 : i32, i32
  }
  func.func @transform_1(%arg0: i32) -> (i32, i32) {
    %c0_i32 = arith.constant 0 : i32
    %c0_i32_0 = arith.constant 0 : i32
    %c0_i32_1 = arith.constant 0 : i32
    return %c0_i32, %c0_i32_0 : i32, i32
  }
  func.func @transform_2(%arg0: i32) -> (i32, i32) {
    %c0_i32 = arith.constant 0 : i32
    %c0_i32_0 = arith.constant 0 : i32
    %c0_i32_1 = arith.constant 0 : i32
    return %c0_i32, %c0_i32_0 : i32, i32
  }
  func.func @transform_3(%arg0: i32) -> (i32, i32) {
    %c0_i32 = arith.constant 0 : i32
    %c0_i32_0 = arith.constant 0 : i32
    %c0_i32_1 = arith.constant 0 : i32
    return %c0_i32, %c0_i32_0 : i32, i32
  }
  func.func @transform_4(%arg0: i32) -> (i32, i32) {
    %c0_i32 = arith.constant 0 : i32
    %c0_i32_0 = arith.constant 0 : i32
    %c0_i32_1 = arith.constant 0 : i32
    return %c0_i32, %c0_i32_0 : i32, i32
  }
  func.func @transform_5(%arg0: i32) -> (i32, i32) {
    %c0_i32 = arith.constant 0 : i32
    %c0_i32_0 = arith.constant 0 : i32
    %c0_i32_1 = arith.constant 0 : i32
    return %c0_i32, %c0_i32_0 : i32, i32
  }
  func.func @transform_6(%arg0: i32) -> (i32, i32) {
    %c0_i32 = arith.constant 0 : i32
    %c0_i32_0 = arith.constant 0 : i32
    return %arg0, %c0_i32 : i32, i32
  }
}

</mosaic_0001>

<llo_original>
// kernel: tpu_custom_call.1
$region0: #{tpu_custom_call.1}
  #allocation0 [shape = 'u32[]', space=smem, size = 0x4, offset = 0x4, fixed_abs, tag = 'smem constant byte address 0x4 - core index']
  #allocation1 [shape = 'u32[72,128]{1,0:T(1,128)}', space=vmem, size = 0x9000, scoped, tag = 'internal scratch']
  %s0 = inlined_call_operand.vmem [shape: f32[8,1], index: 0, kind: input, shape index: {}]
  %s1 = inlined_call_operand.vmem [shape: f32[1,32], index: 1, kind: input, shape index: {}]
  %s2 = inlined_call_operand.vmem [shape: s32[1,32], index: 2, kind: input, shape index: {}]
  %s3 = inlined_call_operand.vmem [shape: f32[1,32], index: 3, kind: input, shape index: {}]
  %s4 = inlined_call_operand.hbm [shape: f32[32,32], index: 4, kind: input, shape index: {}]
  %s5 = inlined_call_operand.vmem [shape: f32[1,32], index: 5, kind: input, shape index: {}]
  %s6 = inlined_call_operand.hbm [shape: f32[8,32], index: 6, kind: output, shape index: {}]
  %s7 = sld [smem:[#allocation0]]
  $region38: #{tpu_custom_call.1} parent=0
    _
  %s9 = ssub.s32 1, %s7
  %s10 = scalar_select 0, %s9, %s7
  $region1: #{tpu_custom_call.1} parent=0
    #allocation2 [shape = 'u8[16384]{0}', space=vmem, size = 0x4000, scoped, tag = 'input window, operand 4, single buffered']
    #allocation3 [shape = 's32[1]{0}', space=sflag, size = 0x4, scoped, tag = 'scoped memory for tpu_custom_call.1']
    #allocation4 [shape = 's32[1]{0}', space=sflag, size = 0x4, scoped, tag = 'scoped memory for tpu_custom_call.1']
    #allocation5 [shape = 'u8[8192]{0}', space=vmem, size = 0x2000, scoped, tag = 'output window, operand 0, single buffered']
    %11 = vsyncpa [#allocation3], 0
    %12 = vsyncpa [#allocation4], 0
    // Predicated region
    $region2: #{tpu_custom_call.1} parent=1 // pred_check
      _
    $region3: #{tpu_custom_call.1} parent=1 // pred_check_branch
      %14 = sbr.rel (0) target = $region5
    $region4: #{tpu_custom_call.1} parent=1 // pred_region
      _
    $region5: #{tpu_custom_call.1} parent=1 // pred_fallthru
      _
    // Predicated region
    $region6: #{tpu_custom_call.1} parent=1 // pred_check
      _
    $region7: #{tpu_custom_call.1} parent=1 // pred_check_branch
      %16 = sbr.rel (0) target = $region9
    $region8: #{tpu_custom_call.1} parent=1 // pred_region
      _
    $region9: #{tpu_custom_call.1} parent=1 // pred_fallthru
      _
    // Predicated region
    $region10: #{tpu_custom_call.1} parent=1 // pred_check
      _
    $region11: #{tpu_custom_call.1} parent=1 // pred_check_branch
      %18 = sbr.rel (0) target = $region13
    $region12: #{tpu_custom_call.1} parent=1 // pred_region
      _
    $region13: #{tpu_custom_call.1} parent=1 // pred_fallthru
      _
    // Predicated region
    $region14: #{tpu_custom_call.1} parent=1 // pred_check
      _
    $region15: #{tpu_custom_call.1} parent=1 // pred_check_branch
      %20 = sbr.rel (0) target = $region17
    $region16: #{tpu_custom_call.1} parent=1 // pred_region
      _
    $region17: #{tpu_custom_call.1} parent=1 // pred_fallthru
      _
    // Predicated region
    $region18: #{tpu_custom_call.1} parent=1 // pred_check
      _
    $region19: #{tpu_custom_call.1} parent=1 // pred_check_branch
      %22 = sbr.rel (0) target = $region21
    $region20: #{tpu_custom_call.1} parent=1 // pred_region
      %24 = vsyncadd [#allocation3], 0
      %s25 = sshll.u32 %s4, 4
      %s26 = int_to_ptr.hbm [resolvable:$true] %s25
      %s27 = sshll.u32 [#allocation2], 4
      %s28 = int_to_ptr.vmem [resolvable:$true] %s27
      %33 = dma.hbm_to_vmem [thread:$0]  %s26, 512, %s28, [#allocation3], 128, 128, 8
    $region21: #{tpu_custom_call.1} parent=1 // pred_fallthru
      _
    // Predicated region
    $region22: #{tpu_custom_call.1} parent=1 // pred_check
      _
    $region23: #{tpu_custom_call.1} parent=1 // pred_check_branch
      %35 = sbr.rel (0) target = $region25
    $region24: #{tpu_custom_call.1} parent=1 // pred_region
      _
    $region25: #{tpu_custom_call.1} parent=1 // pred_fallthru
      _
    // Predicated region
    $region26: #{tpu_custom_call.1} parent=1 // pred_check
      _
    $region27: #{tpu_custom_call.1} parent=1 // pred_check_branch
      %37 = sbr.rel (0) target = $region29
    $region28: #{tpu_custom_call.1} parent=1 // pred_region
      %39 = dma.done [#allocation3], 512
    $region29: #{tpu_custom_call.1} parent=1 // pred_fallthru
      _
    %v40 = vld [vmem:[%s0] sm:$0xff]
    %v41 = vld [vmem:[%s0 + $0x8] sm:$0xff]
    %v42 = vld [vmem:[%s1] sm:$0x1]
    %44 = vset.pattern.permute.xlu0 0
    %45 = vperm.xlu0 %44, %v40
    %v46 = vpop.permute.xlu0 %45
    %49 = vset.pattern.permute.xlu0 0
    %50 = vperm.xlu0 %49, %v41
    %v51 = vpop.permute.xlu0 %50
    %v54 = vperm.slane %v42, 0
    %v56 = vmul.f32 %v46, %v54
    %v57 = vmul.f32 %v51, %v54
    %v58 = vmul.f32 %v56, 0.63661975
    %v59 = vmul.f32 %v57, 0.63661975
    %v60 = vadd.f32 %v58, 0.5
    %v61 = vadd.f32 %v59, 0.5
    %v62 = vfloor.f32 %v60
    %v63 = vfloor.f32 %v61
    %v64 = vmul.f32 %v62, 1.5703125
    %v65 = vmul.f32 %v63, 1.5703125
    %v66 = vsub.f32 %v56, %v64
    %v67 = vsub.f32 %v57, %v65
    %v68 = vmul.f32 %v62, 0.0004837513
    %v69 = vmul.f32 %v63, 0.0004837513
    %v70 = vsub.f32 %v66, %v68
    %v71 = vsub.f32 %v67, %v69
    %v72 = vmul.f32 %v62, 7.54979e-08
    %v73 = vmul.f32 %v63, 7.54979e-08
    %v74 = vsub.f32 %v70, %v72
    %v75 = vsub.f32 %v71, %v73
    %v76 = vmul.f32 %v74, %v74
    %v77 = vmul.f32 %v75, %v75
    %v78 = vmul.f32 %v74, %v76
    %v79 = vmul.f32 %v75, %v77
    %v80 = vmul.f32 %v76, -0.00019515296
    %v81 = vmul.f32 %v77, -0.00019515296
    %v82 = vadd.f32 %v80, 0.008332161
    %v83 = vadd.f32 %v81, 0.008332161
    %v84 = vmul.f32 %v76, %v82
    %v85 = vmul.f32 %v77, %v83
    %v86 = vadd.f32 %v84, -0.16666655
    %v87 = vadd.f32 %v85, -0.16666655
    %v88 = vmul.f32 %v78, %v86
    %v89 = vmul.f32 %v79, %v87
    %v90 = vadd.f32 %v74, %v88
    %v91 = vadd.f32 %v75, %v89
    %v92 = vmul.f32 %v76, 0.5
    %v93 = vmul.f32 %v77, 0.5
    %v94 = vsub.f32 1.0, %v92
    %v95 = vsub.f32 1.0, %v93
    %v96 = vmul.f32 %v76, %v76
    %v97 = vmul.f32 %v77, %v77
    %v98 = vmul.f32 %v76, 2.4433157e-05
    %v99 = vmul.f32 %v77, 2.4433157e-05
    %v100 = vadd.f32 %v98, -0.0013887316
    %v101 = vadd.f32 %v99, -0.0013887316
    %v102 = vmul.f32 %v76, %v100
    %v103 = vmul.f32 %v77, %v101
    %v104 = vadd.f32 %v102, 0.041666646
    %v105 = vadd.f32 %v103, 0.041666646
    %v106 = vmul.f32 %v96, %v104
    %v107 = vmul.f32 %v97, %v105
    %v108 = vadd.f32 %v94, %v106
    %v109 = vadd.f32 %v95, %v107
    %v110 = vcvt.f32.s32.to.zero.pseudo %v62
    %v111 = vcvt.f32.s32.to.zero.pseudo %v63
    %v112 = vld [vmem:[%s2] sm:$0x1]
    %v113 = vperm.slane %v112, 0
    %v114 = vadd.s32 %v110, %v113
    %v115 = vadd.s32 %v111, %v113
    %v116 = vand.u32 %v114, 3
    %v117 = vand.u32 %v115, 3
    %v118 = vand.u32 %v116, 1
    %v119 = vand.u32 %v117, 1
    %vm120 = vcmp.eq.s32.totalorder %v118, 1
    %vm121 = vcmp.eq.s32.totalorder %v119, 1
    %v122 = vsel %vm120, %v108, %v90
    %v123 = vsel %vm121, %v109, %v91
    %v124 = vand.u32 %v116, 2
    %v125 = vand.u32 %v117, 2
    %vm126 = vcmp.eq.s32.totalorder %v124, 2
    %vm127 = vcmp.eq.s32.totalorder %v125, 2
    %v128 = vsub.f32 0.0, %v122
    %v129 = vsub.f32 0.0, %v123
    %v130 = vsel %vm126, %v128, %v122
    %v131 = vsel %vm127, %v129, %v123
    %v132 = vld [vmem:[%s3] sm:$0x1]
    %v134 = vperm.slane %v132, 0
    %v136 = vmul.f32 %v46, %v134
    %v137 = vmul.f32 %v51, %v134
    %v138 = vld [vmem:[#allocation2] sm:$0xff]
    %v139 = vld [vmem:[#allocation2 + $0x8] sm:$0xff]
    %v140 = vld [vmem:[#allocation2 + $0x10] sm:$0xff]
    %v141 = vld [vmem:[#allocation2 + $0x18] sm:$0xff]
    %vm142 = vcmask 261120
    %v144 = vsel %vm142, %v130, 0
    %v147 = vsel %vm142, %v131, 0
    %149 = vmatpush.msra.mxu0 0.0
    %150 = vmatpush.msra.mxu0 0.0
    %151 = vmatpush.msra.mxu0 0.0
    %152 = vmatpush.msra.mxu0 0.0
    %153 = vmatpush.msra.mxu0 0.0
    %154 = vmatpush.msra.mxu0 0.0
    %155 = vmatpush.msra.mxu0 0.0
    %156 = vmatpush.msra.mxu0 0.0
    %157 = vmatpush.msra.mxu0 0.0
    %158 = vmatpush.msra.mxu0 0.0
    %159 = vmatpush.msra.mxu0 0.0
    %160 = vmatpush.msra.mxu0 0.0
    %161 = vmatpush.msra.mxu0 %v141
    %162 = vmatpush.msra.mxu0 %v140
    %163 = vmatpush.msra.mxu0 %v139
    %164 = vmatpush.msra.mxu0 %v138
    %165 = vmatmul.f32.gmra.mxu0 %v144
    %v166 = vpop.f32.mrf.mxu0
    %v167 = vadd.f32 0.0, %v166
    %168 = vmatmul.f32.gmra.mxu0 %v147
    %v169 = vpop.f32.mrf.mxu0
    %v170 = vadd.f32 0.0, %v169
    %171 = vdwg.mxu0
    %v172 = vadd.f32 %v136, %v167
    %v173 = vadd.f32 %v137, %v170
    %v174 = vld [vmem:[%s5] sm:$0x1]
    %v176 = vperm.slane %v174, 0
    %v178 = vadd.f32 %v172, %v176
    %v179 = vadd.f32 %v173, %v176
    %180 = vst.msk [vmem:[#allocation5] sm:$0xff] %vm142, %v178
    %181 = vst.msk [vmem:[#allocation5 + $0x8] sm:$0xff] %vm142, %v179
    // Predicated region
    $region30: #{tpu_custom_call.1} parent=1 // pred_check
      _
    $region31: #{tpu_custom_call.1} parent=1 // pred_check_branch
      %183 = sbr.rel (0) target = $region33
    $region32: #{tpu_custom_call.1} parent=1 // pred_region
      %185 = vsyncadd [#allocation4], 128
      %s186 = sshll.u32 [#allocation5], 4
      %s187 = int_to_ptr.vmem [resolvable:$true] %s186
      %s188 = sshll.u32 %s6, 4
      %s189 = int_to_ptr.hbm [resolvable:$true] %s188
      %194 = dma.vmem_to_hbm [thread:$0]  %s187, 128, %s189, [#allocation4], 128, 128, 8
    $region33: #{tpu_custom_call.1} parent=1 // pred_fallthru
      _
    // Predicated region
    $region34: #{tpu_custom_call.1} parent=1 // pred_check
      _
    $region35: #{tpu_custom_call.1} parent=1 // pred_check_branch
      %196 = sbr.rel (0) target = $region37
    $region36: #{tpu_custom_call.1} parent=1 // pred_region
      %198 = dma.done [#allocation4], 256
    $region37: #{tpu_custom_call.1} parent=1 // pred_fallthru
      _
    %199 = vsyncpa [#allocation3], 1
    %200 = vsyncpa [#allocation4], 1

</llo_original>
